<compile_context>
chip_gen: v7x
topology: tpu7x:2x2x1
jax: 0.10.0
libtpu: 0.0.40
codegen_flags: <defaults>
</compile_context>

<pallas_src>
import jax
import jax.numpy as jnp
from jax import lax
from jax.experimental import pallas as pl
from jax.experimental.pallas import tpu as pltpu

_LANE = 128
_SUB = 8


def _round_up(x, m):
    return (x + m - 1) // m * m


def _cdiv(a, b):
    return (a + b - 1) // b


def _choose_tiles(N, Cin, Cout, HW):
    """Pick (TB, TL) = (batch tile, lane tile) for the HBM-bound 1x1 conv."""
    cin_p = _round_up(Cin, _SUB)
    cout_p = _round_up(Cout, _SUB)
    bytes_per_lane = 4 * (cin_p + cout_p)          # f32 in + out traffic per lane column

    # Lane tile: as big as possible (amortize ~0.35us per grid step).  Full-dim block
    # when the whole spatial axis fits; otherwise a multiple of 128 (final partial tile
    # is masked by Pallas).
    MAX_TL = 8192
    TL = HW if HW <= MAX_TL else MAX_TL

    # Batch-fuse small images so each grid step moves >= ~1 MiB of HBM.
    TARGET = 1 << 20
    TB = 1
    if bytes_per_lane * TL < TARGET:
        TB = min(N, _cdiv(TARGET, bytes_per_lane * TL))
        TB = max(1, min(TB, 16))                   # keep the in-kernel unroll small

    # VMEM budget: double-buffered input + output tiles, well under v7x's 64 MiB.
    def vmem_tiles(tb, tl):
        return 2 * tb * (cin_p + cout_p) * _round_up(tl, _LANE) * 4

    BUDGET = 40 << 20
    while TB > 1 and vmem_tiles(TB, TL) > BUDGET:
        TB -= 1
    while TL > _LANE and vmem_tiles(TB, TL) > BUDGET:
        TL = max(_LANE, (TL // 2) // _LANE * _LANE)

    # v7x megacore: keep >= 2 grid cells when possible so both TensorCores get work.
    if _cdiv(N, TB) * _cdiv(HW, TL) < 2:
        if TB > 1:
            TB = max(1, TB // 2)
        elif HW > _LANE:
            TL = max(_LANE, _round_up(_cdiv(TL, 2), _LANE))

    return TB, TL, vmem_tiles(TB, TL)


def _conv1x1_kernel(x_ref, w_ref, b_ref, o_ref):
    """One (batch-tile, spatial-tile) grid cell:  o[i] = W @ x[i] + b.

    x_ref: (TB, Cin, TL) f32   w_ref: (Cout, Cin) f32 (resident)
    b_ref: (Cout, 1)    f32    o_ref: (TB, Cout, TL) f32
    """
    w = w_ref[...]
    b = b_ref[...]
    for i in range(x_ref.shape[0]):                # static unroll over the batch tile
        y = jnp.dot(w, x_ref[i], preferred_element_type=jnp.float32)
        o_ref[i] = y + b                           # bias/epilogue in f32


def out_conv(x_nchw, weight, bias):
    """PyTorch OutConv.forward: nn.Conv2d(in_channel, out_classes, kernel_size=1).

    x_nchw: (N, Cin, H, W) f32, weight: (Cout, Cin, 1, 1), bias: (Cout,).
    Returns (N, Cout, H, W) f32.
    """
    N, Cin, H, W = x_nchw.shape
    Cout = weight.shape[0]
    HW = H * W

    TB, TL, vmem_tile_bytes = _choose_tiles(N, Cin, Cout, HW)

    x = x_nchw.reshape(N, Cin, HW)                 # contiguous view — no transpose, no pad
    w = weight.reshape(Cout, Cin).astype(jnp.float32)
    b = bias.reshape(Cout, 1).astype(jnp.float32)

    grid = (_cdiv(N, TB), _cdiv(HW, TL))
    vmem_limit = int(min(max(2 * vmem_tile_bytes, 32 << 20), 48 << 20))
    cost = pl.CostEstimate(
        flops=2 * N * Cout * Cin * HW,
        transcendentals=0,
        bytes_accessed=4 * (N * HW * (Cin + Cout) + Cout * Cin + Cout),
    )

    out = pl.pallas_call(
        _conv1x1_kernel,
        grid=grid,
        out_shape=jax.ShapeDtypeStruct((N, Cout, HW), jnp.float32),
        in_specs=[
            pl.BlockSpec((TB, Cin, TL), lambda n, l: (n, 0, l)),   # activation tile
            pl.BlockSpec((Cout, Cin), lambda n, l: (0, 0)),        # weight, resident
            pl.BlockSpec((Cout, 1), lambda n, l: (0, 0)),          # bias, resident
        ],
        out_specs=pl.BlockSpec((TB, Cout, TL), lambda n, l: (n, 0, l)),
        compiler_params=pltpu.CompilerParams(
            dimension_semantics=("parallel", "parallel"),
            vmem_limit_bytes=vmem_limit,
        ),
        cost_estimate=cost,
    )(x, w, b)

    return out.reshape(N, Cout, H, W)


if __name__ == "__main__":
    key = jax.random.PRNGKey(0)

    def ref_conv(x, weight, bias):
        Cout, Cin = weight.shape[0], weight.shape[1]
        return (jnp.einsum("nchw,oc->nohw", x, weight.reshape(Cout, Cin),
                           precision=lax.Precision.HIGHEST)
                + bias[None, :, None, None])

    # Case 1: typical small OutConv head (final 1x1 classifier conv).
    N, Cin, H, W, Cout = 2, 32, 32, 32, 10
    k1, k2, k3, key = jax.random.split(key, 4)
    x = jax.random.normal(k1, (N, Cin, H, W), jnp.float32)
    weight = jax.random.normal(k2, (Cout, Cin, 1, 1), jnp.float32) * 0.1
    bias = jax.random.normal(k3, (Cout,), jnp.float32) * 0.1
    out = jax.block_until_ready(jax.jit(out_conv)(x, weight, bias))
    assert out.shape == (N, Cout, H, W), out.shape
    err1 = float(jnp.max(jnp.abs(out - ref_conv(x, weight, bias))))
    assert err1 < 3e-2, err1

    # Case 2: non-128-divisible spatial size and odd channel counts (exercises the
    # pad-free path with full-dim spatial blocks / masked partial tiles).
    N2, Cin2, H2, W2, Cout2 = 3, 5, 10, 14, 7
    k1, k2, k3, key = jax.random.split(key, 4)
    x2 = jax.random.normal(k1, (N2, Cin2, H2, W2), jnp.float32)
    w2 = jax.random.normal(k2, (Cout2, Cin2, 1, 1), jnp.float32) * 0.1
    b2 = jax.random.normal(k3, (Cout2,), jnp.float32) * 0.1
    out2 = jax.block_until_ready(jax.jit(out_conv)(x2, w2, b2))
    assert out2.shape == (N2, Cout2, H2, W2), out2.shape
    err2 = float(jnp.max(jnp.abs(out2 - ref_conv(x2, w2, b2))))
    assert err2 < 3e-2, err2

    print("KERNEL_OK")
</pallas_src>

<mosaic_0001>
module attributes {stable_mosaic.version = 11 : i64} {
  func.func @_conv1x1_kernel(%arg0: i32, %arg1: i32, %arg2: memref<1x32x1024xf32, #tpu.memory_space<vmem>>, %arg3: memref<10x32xf32, #tpu.memory_space<vmem>>, %arg4: memref<10x1xf32, #tpu.memory_space<vmem>>, %arg5: memref<1x10x1024xf32, #tpu.memory_space<vmem>>) attributes {dimension_semantics = [#tpu.dimension_semantics<parallel>, #tpu.dimension_semantics<parallel>], iteration_bounds = array<i64: 2, 1>, scalar_prefetch = 0 : i64, scratch_operands = 0 : i64, tpu.core_type = #tpu.core_type<tc>, window_params = [{transform_indices = @transform_0, window_bounds = array<i64: 1, 32, 1024>}, {pipeline_mode = #tpu.pipeline_mode<synchronous>, transform_indices = @transform_1, window_bounds = array<i64: 10, 32>}, {pipeline_mode = #tpu.pipeline_mode<synchronous>, transform_indices = @transform_2, window_bounds = array<i64: 10, 1>}, {transform_indices = @transform_3, window_bounds = array<i64: 1, 10, 1024>}]} {
    %c0 = arith.constant 0 : index
    %c0_0 = arith.constant 0 : index
    %0 = vector.load %arg3[%c0, %c0_0] : memref<10x32xf32, #tpu.memory_space<vmem>>, vector<10x32xf32>
    %c0_1 = arith.constant 0 : index
    %c0_2 = arith.constant 0 : index
    %1 = vector.load %arg4[%c0_1, %c0_2] : memref<10x1xf32, #tpu.memory_space<vmem>>, vector<10x1xf32>
    %c0_3 = arith.constant 0 : index
    %c0_4 = arith.constant 0 : index
    %c0_5 = arith.constant 0 : index
    %2 = vector.load %arg2[%c0_3, %c0_4, %c0_5] : memref<1x32x1024xf32, #tpu.memory_space<vmem>>, vector<1x32x1024xf32>
    %3 = vector.shape_cast %2 : vector<1x32x1024xf32> to vector<32x1024xf32>
    %cst = arith.constant dense<0.000000e+00> : vector<10x1024xf32>
    %4 = tpu.matmul %0, %3, %cst {dimension_numbers = #tpu.dot_dimension_numbers<[1], [0], [0], [1], [0, 0, 1, 1], [], []>} : vector<10x32xf32>, vector<32x1024xf32>, vector<10x1024xf32> -> vector<10x1024xf32>
    %5 = vector.broadcast %1 : vector<10x1xf32> to vector<10x1024xf32>
    %6 = arith.addf %4, %5 : vector<10x1024xf32>
    %c0_6 = arith.constant 0 : index
    %c0_7 = arith.constant 0 : index
    %c0_8 = arith.constant 0 : index
    %7 = vector.load %arg5[%c0_6, %c0_7, %c0_8] : memref<1x10x1024xf32, #tpu.memory_space<vmem>>, vector<1x10x1024xf32>
    %8 = vector.shape_cast %7 : vector<1x10x1024xf32> to vector<10x1024xf32>
    %9 = vector.shape_cast %6 : vector<10x1024xf32> to vector<1x10x1024xf32>
    tpu.vector_store %arg5[%c0_6, %c0_7, %c0_8], %9 {strides = array<i32>} : memref<1x10x1024xf32, #tpu.memory_space<vmem>>, vector<1x10x1024xf32>,
    return
  }
  func.func @transform_0(%arg0: i32, %arg1: i32) -> (i32, i32, i32) {
    %c0_i32 = arith.constant 0 : i32
    %c0_i32_0 = arith.constant 0 : i32
    return %arg0, %c0_i32, %arg1 : i32, i32, i32
  }
  func.func @transform_1(%arg0: i32, %arg1: i32) -> (i32, i32) {
    %c0_i32 = arith.constant 0 : i32
    %c0_i32_0 = arith.constant 0 : i32
    %c0_i32_1 = arith.constant 0 : i32
    return %c0_i32, %c0_i32_0 : i32, i32
  }
  func.func @transform_2(%arg0: i32, %arg1: i32) -> (i32, i32) {
    %c0_i32 = arith.constant 0 : i32
    %c0_i32_0 = arith.constant 0 : i32
    %c0_i32_1 = arith.constant 0 : i32
    return %c0_i32, %c0_i32_0 : i32, i32
  }
  func.func @transform_3(%arg0: i32, %arg1: i32) -> (i32, i32, i32) {
    %c0_i32 = arith.constant 0 : i32
    %c0_i32_0 = arith.constant 0 : i32
    return %arg0, %c0_i32, %arg1 : i32, i32, i32
  }
}

</mosaic_0001>

<llo_original>
// kernel: out_conv.1
$region0: #{out_conv.1}
  #allocation0 [shape = 'u32[]', space=smem, size = 0x4, offset = 0x4, fixed_abs, tag = 'smem constant byte address 0x4 - core index']
  #allocation1 [shape = 'u32[144,128]{1,0:T(1,128)}', space=vmem, size = 0x12000, scoped, tag = 'internal scratch']
  %s0 = inlined_call_operand.vmem [shape: f32[2,32,1024], index: 0, kind: input, shape index: {}]
  %s1 = inlined_call_operand.vmem [shape: f32[10,32], index: 1, kind: input, shape index: {}]
  %s2 = inlined_call_operand.vmem [shape: f32[10,1], index: 2, kind: input, shape index: {}]
  %s3 = inlined_call_operand.vmem [shape: f32[2,10,1024], index: 3, kind: output, shape index: {}]
  %s4 = sld [smem:[#allocation0]]
  $region45: #{out_conv.1} parent=0
    _
  %s6 = ssub.s32 1, %s4
  %s7 = scalar_select 0, %s6, %s4
  loop: start=0, step=1, limit=4
  $region2: #{out_conv.1} parent=0 // loop_pre_header
    _
  $region3: #{out_conv.1} parent=0 // loop_header
    %s9 = sphi 0, %s13
    %p10 = scmp.ge.s32.totalorder %s9, 4
    %s16 = sphi 0, %s28
    %s17 = sphi 0, %s24
    %s18 = sphi 0, %s16
    %s19 = sphi 0, %s17
    %s20 = sphi 0, %s18
    %s21 = sphi 0, %s19
    %s33 = sphi 0, %s35
    %s36 = sphi 0, %s33
    %s37 = sphi 0, %s36
    %s53 = sphi 0, %s37
    %s57 = sphi 0, %s57
    %s59 = sphi 0, %s57
    %s60 = sphi 0, %s59
    %s74 = sphi 0, %s60
    %s78 = sphi 0, %s78
    %s80 = sphi 0, %s78
    %s81 = sphi 0, %s80
    %s95 = sphi 0, %s81
    %s103 = sphi 0, %s105
    %s106 = sphi 0, %s103
    %s107 = sphi 0, %s106
    %s123 = sphi 0, %s107
  $region4: #{out_conv.1} parent=0 // loop_header_branch
    %12 = sbr.rel (%p10) target = $region8
  $region5: #{out_conv.1} parent=0 // loop_body
    %s14 = ssub.s32 %s9, 1
    %s15 = ssub.s32 %s9, 2
    %s22 = sadd.s32 1, %s17
    %p23 = scmp.ge.s32.totalorder %s22, 1
    %s24 = scalar_select %p23, 0, %s22
    %s25 = sadd.s32 1, %s16
    %s26 = scalar_select %p23, %s25, %s16
    %p27 = scmp.ge.s32.totalorder %s26, 2
    %s28 = scalar_select %p27, 0, %s26
    %s29 = ssub.s32 %s16, %s28
    %s30 = ssub.s32 %s17, %s24
    %s31 = sor.u32 %s29, %s30
    %p32 = scmp.eq.s32.totalorder %s31, 0
    %s34 = sadd.s32 %s33, 1
    %s35 = scalar_select %p32, %s33, %s34
    %p38 = pneg %p32
    %p39 = scmp.eq.s32.totalorder %s9, 1
    %p40 = por %p38, %p39
    %p41 = scmp.ne.s32.totalorder %s33, %s36
    %p42 = scmp.eq.s32.totalorder %s9, 0
    %p43 = por %p41, %p42
    %p44 = scmp.ne.s32.totalorder %s33, %s36
    %p45 = scmp.eq.s32.totalorder %s14, 1
    %p46 = por %p44, %p45
    %p47 = scmp.ne.s32.totalorder %s36, %s37
    %p48 = scmp.eq.s32.totalorder %s14, 0
    %p49 = por %p47, %p48
    %p50 = scmp.ne.s32.totalorder %s36, %s37
    %p51 = scmp.eq.s32.totalorder %s15, 1
    %p52 = por %p50, %p51
    %p54 = scmp.ne.s32.totalorder %s37, %s53
    %p55 = scmp.eq.s32.totalorder %s15, 0
    %p56 = por %p54, %p55
    %s58 = sadd.s32 %s57, 1
    %p61 = scmp.eq.s32.totalorder %s9, 1
    %p62 = scmp.ne.s32.totalorder %s57, %s59
    %p63 = scmp.eq.s32.totalorder %s9, 0
    %p64 = por %p62, %p63
    %p65 = scmp.ne.s32.totalorder %s57, %s59
    %p66 = scmp.eq.s32.totalorder %s14, 1
    %p67 = por %p65, %p66
    %p68 = scmp.ne.s32.totalorder %s59, %s60
    %p69 = scmp.eq.s32.totalorder %s14, 0
    %p70 = por %p68, %p69
    %p71 = scmp.ne.s32.totalorder %s59, %s60
    %p72 = scmp.eq.s32.totalorder %s15, 1
    %p73 = por %p71, %p72
    %p75 = scmp.ne.s32.totalorder %s60, %s74
    %p76 = scmp.eq.s32.totalorder %s15, 0
    %p77 = por %p75, %p76
    %s79 = sadd.s32 %s78, 1
    %p82 = scmp.eq.s32.totalorder %s9, 1
    %p83 = scmp.ne.s32.totalorder %s78, %s80
    %p84 = scmp.eq.s32.totalorder %s9, 0
    %p85 = por %p83, %p84
    %p86 = scmp.ne.s32.totalorder %s78, %s80
    %p87 = scmp.eq.s32.totalorder %s14, 1
    %p88 = por %p86, %p87
    %p89 = scmp.ne.s32.totalorder %s80, %s81
    %p90 = scmp.eq.s32.totalorder %s14, 0
    %p91 = por %p89, %p90
    %p92 = scmp.ne.s32.totalorder %s80, %s81
    %p93 = scmp.eq.s32.totalorder %s15, 1
    %p94 = por %p92, %p93
    %p96 = scmp.ne.s32.totalorder %s81, %s95
    %p97 = scmp.eq.s32.totalorder %s15, 0
    %p98 = por %p96, %p97
    %s99 = ssub.s32 %s16, %s28
    %s100 = ssub.s32 %s17, %s24
    %s101 = sor.u32 %s99, %s100
    %p102 = scmp.eq.s32.totalorder %s101, 0
    %s104 = sadd.s32 %s103, 1
    %s105 = scalar_select %p102, %s103, %s104
    %p108 = pneg %p102
    %p109 = scmp.eq.s32.totalorder %s9, 1
    %p110 = por %p108, %p109
    %p111 = scmp.ne.s32.totalorder %s103, %s106
    %p112 = scmp.eq.s32.totalorder %s9, 0
    %p113 = por %p111, %p112
    %p114 = scmp.ne.s32.totalorder %s103, %s106
    %p115 = scmp.eq.s32.totalorder %s14, 1
    %p116 = por %p114, %p115
    %p117 = scmp.ne.s32.totalorder %s106, %s107
    %p118 = scmp.eq.s32.totalorder %s14, 0
    %p119 = por %p117, %p118
    %p120 = scmp.ne.s32.totalorder %s106, %s107
    %p121 = scmp.eq.s32.totalorder %s15, 1
    %p122 = por %p120, %p121
    %p124 = scmp.ne.s32.totalorder %s107, %s123
    %p125 = scmp.eq.s32.totalorder %s15, 0
    %p126 = por %p124, %p125
    %p127 = scmp.le.s32.totalorder 1, %s9
    %p128 = scmp.lt.s32.totalorder %s9, 3
    %p129 = pnand %p127, %p128
    %p130 = pneg %p129
    // Predicated region
    $region9: #{out_conv.1} parent=5 // pred_check
      _
    $region10: #{out_conv.1} parent=5 // pred_check_branch
      %132 = sbr.rel (%p129) target = $region12
    $region11: #{out_conv.1} parent=5 // pred_region
      %s133 = ssub.s32 %s9, 1
      // Predicated region
      $region13: #{out_conv.1} parent=11 // pred_check
        %p134 = pneg %p70
      $region14: #{out_conv.1} parent=11 // pred_check_branch
        %136 = sbr.rel (%p134) target = $region16
      $region15: #{out_conv.1} parent=11 // pred_region
        _
      $region16: #{out_conv.1} parent=11 // pred_fallthru
        _
      // Predicated region
      $region17: #{out_conv.1} parent=11 // pred_check
        %p137 = pneg %p91
      $region18: #{out_conv.1} parent=11 // pred_check_branch
        %139 = sbr.rel (%p137) target = $region20
      $region19: #{out_conv.1} parent=11 // pred_region
        _
      $region20: #{out_conv.1} parent=11 // pred_fallthru
        _
    $region12: #{out_conv.1} parent=5 // pred_fallthru
      _
    %p140 = scmp.lt.s32.totalorder %s9, 2
    // Predicated region
    $region21: #{out_conv.1} parent=5 // pred_check
      %p141 = pneg %p140
    $region22: #{out_conv.1} parent=5 // pred_check_branch
      %143 = sbr.rel (%p141) target = $region24
    $region23: #{out_conv.1} parent=5 // pred_region
      // Predicated region
      $region25: #{out_conv.1} parent=23 // pred_check
        %p144 = pneg %p43
      $region26: #{out_conv.1} parent=23 // pred_check_branch
        %146 = sbr.rel (%p144) target = $region28
      $region27: #{out_conv.1} parent=23 // pred_region
        %s147 = smul.u32 8, %s17
        %p148 = scmp.lt.s32.totalorder %s16, 1
        %s149 = scalar_select %p148, %s16, 1
        %p150 = scmp.lt.s32.totalorder %s147, 7
        %s151 = scalar_select %p150, %s147, 7
        %s152 = smul.addr %s149, 32
        %s153 = sadd.s32 %s151, %s152
        %s154 = smul.addr %s153, 8
        %s155 = scalar_lea.vmem %s0, %s154
        %s156 = smul.u32 8, %s17
      $region28: #{out_conv.1} parent=23 // pred_fallthru
        _
    $region24: #{out_conv.1} parent=5 // pred_fallthru
      _
    %p157 = scmp.le.s32.totalorder 1, %s9
    %p158 = scmp.lt.s32.totalorder %s9, 3
    %p159 = pnand %p157, %p158
    %p160 = pneg %p159
    // Predicated region
    $region29: #{out_conv.1} parent=5 // pred_check
      _
    $region30: #{out_conv.1} parent=5 // pred_check_branch
      %162 = sbr.rel (%p159) target = $region32
    $region31: #{out_conv.1} parent=5 // pred_region
      %s163 = ssub.s32 %s9, 1
      %s164 = smul.u32 8, %s19
      %p165 = scmp.lt.s32.totalorder %s18, 1
      %s166 = scalar_select %p165, %s18, 1
      %p167 = scmp.lt.s32.totalorder %s164, 7
      %s168 = scalar_select %p167, %s164, 7
      %s169 = smul.addr %s166, 32
      %s170 = sadd.s32 %s168, %s169
      %s171 = smul.addr %s170, 8
      %s172 = scalar_lea.vmem %s0, %s171
      %p173 = pneg %p49
      %p174 = pneg %p46
      %p175 = pneg %p70
      %p176 = pneg %p67
      %p177 = pneg %p91
      %p178 = pneg %p88
      %p179 = pneg %p119
      %p180 = pneg %p116
      %s181 = smul.u32 8, %s19
      %p182 = scmp.lt.s32.totalorder %s18, 1
      %s183 = scalar_select %p182, %s18, 1
      %p184 = scmp.lt.s32.totalorder %s181, 7
      %s185 = scalar_select %p184, %s181, 7
      %s186 = smul.addr %s183, 16
      %s187 = sadd.s32 %s185, %s186
      %s188 = smul.addr %s187, 8
      %s189 = scalar_lea.vmem %s3, %s188
      %s190 = smul.u32 8, %s19
      %p191 = scmp.lt.s32.totalorder %s18, 1
      %s192 = scalar_select %p191, %s18, 1
      %p193 = scmp.lt.s32.totalorder %s190, 7
      %s194 = scalar_select %p193, %s190, 7
      %s195 = smul.addr %s192, 32
      %s196 = sadd.s32 %s194, %s195
      %s197 = smul.addr %s196, 8
      %s198 = scalar_lea.vmem %s0, %s197
      %s199 = smul.u32 8, %s19
      %s200 = smul.u32 8, %s19
      %p201 = scmp.lt.s32.totalorder %s18, 1
      %s202 = scalar_select %p201, %s18, 1
      %p203 = scmp.lt.s32.totalorder %s200, 7
      %s204 = scalar_select %p203, %s200, 7
      %s205 = smul.addr %s202, 16
      %s206 = sadd.s32 %s204, %s205
      %s207 = smul.addr %s206, 8
      %s208 = scalar_lea.vmem %s3, %s207
      %s209 = smul.u32 8, %s19
      %v210 = vld [vmem:[%s1] sm:$0xff]
      %v211 = vld [vmem:[%s1 + $0x8] sm:$0x3]
      %v212 = vld [vmem:[%s2] sm:$0xff]
      %v213 = vld [vmem:[%s2 + $0x8] sm:$0x3]
      %v214 = vld [vmem:[%s198] sm:$0xff]
      %v215 = vld [vmem:[%s198 + $0x8] sm:$0xff]
      %v216 = vld [vmem:[%s198 + $0x10] sm:$0xff]
      %v217 = vld [vmem:[%s198 + $0x18] sm:$0xff]
      %v218 = vld [vmem:[%s198 + $0x20] sm:$0xff]
      %v219 = vld [vmem:[%s198 + $0x28] sm:$0xff]
      %v220 = vld [vmem:[%s198 + $0x30] sm:$0xff]
      %v221 = vld [vmem:[%s198 + $0x38] sm:$0xff]
      %v222 = vld [vmem:[%s198 + $0x40] sm:$0xff]
      %v223 = vld [vmem:[%s198 + $0x48] sm:$0xff]
      %v224 = vld [vmem:[%s198 + $0x50] sm:$0xff]
      %v225 = vld [vmem:[%s198 + $0x58] sm:$0xff]
      %v226 = vld [vmem:[%s198 + $0x60] sm:$0xff]
      %v227 = vld [vmem:[%s198 + $0x68] sm:$0xff]
      %v228 = vld [vmem:[%s198 + $0x70] sm:$0xff]
      %v229 = vld [vmem:[%s198 + $0x78] sm:$0xff]
      %v230 = vld [vmem:[%s198 + $0x80] sm:$0xff]
      %v231 = vld [vmem:[%s198 + $0x88] sm:$0xff]
      %v232 = vld [vmem:[%s198 + $0x90] sm:$0xff]
      %v233 = vld [vmem:[%s198 + $0x98] sm:$0xff]
      %v234 = vld [vmem:[%s198 + $0xa0] sm:$0xff]
      %v235 = vld [vmem:[%s198 + $0xa8] sm:$0xff]
      %v236 = vld [vmem:[%s198 + $0xb0] sm:$0xff]
      %v237 = vld [vmem:[%s198 + $0xb8] sm:$0xff]
      %v238 = vld [vmem:[%s198 + $0xc0] sm:$0xff]
      %v239 = vld [vmem:[%s198 + $0xc8] sm:$0xff]
      %v240 = vld [vmem:[%s198 + $0xd0] sm:$0xff]
      %v241 = vld [vmem:[%s198 + $0xd8] sm:$0xff]
      %v242 = vld [vmem:[%s198 + $0xe0] sm:$0xff]
      %v243 = vld [vmem:[%s198 + $0xe8] sm:$0xff]
      %v244 = vld [vmem:[%s198 + $0xf0] sm:$0xff]
      %v245 = vld [vmem:[%s198 + $0xf8] sm:$0xff]
      %247 = vset.pattern.permute.xlu0 0
      %248 = vperm.xlu0 %247, %v212
      %v249 = vpop.permute.xlu0 %248
      %252 = vset.pattern.permute.xlu0 0
      %253 = vperm.xlu0 %252, %v213
      %v254 = vpop.permute.xlu0 %253
      %vm256 = vcmask 261120
      %v258 = vsel %vm256, %v210, 0
      %v261 = vsel %vm256, %v211, 0
      %263 = vmatprep.subr.mxu0 %v215
      %264 = vmatpush1.msra.mxu0 %v214
      %265 = vmatprep.subr.mxu0 %v223
      %266 = vmatpush1.msra.mxu0 %v222
      %267 = vmatprep.subr.mxu0 %v231
      %268 = vmatpush1.msra.mxu0 %v230
      %269 = vmatprep.subr.mxu0 %v239
      %270 = vmatpush1.msra.mxu0 %v238
      %271 = vmatprep.subr.mxu0 0.0
      %272 = vmatpush1.msra.mxu0 0.0
      %273 = vmatprep.subr.mxu0 0.0
      %274 = vmatpush1.msra.mxu0 0.0
      %275 = vmatprep.subr.mxu0 0.0
      %276 = vmatpush1.msra.mxu0 0.0
      %277 = vmatprep.subr.mxu0 0.0
      %278 = vmatpush1.msra.mxu0 0.0
      %279 = vmatprep.subr.mxu0 0.0
      %280 = vmatpush1.msra.mxu0 0.0
      %281 = vmatprep.subr.mxu0 0.0
      %282 = vmatpush1.msra.mxu0 0.0
      %283 = vmatprep.subr.mxu0 0.0
      %284 = vmatpush1.msra.mxu0 0.0
      %285 = vmatprep.subr.mxu0 0.0
      %286 = vmatpush1.msra.mxu0 0.0
      %287 = vmatprep.subr.mxu0 0.0
      %288 = vmatpush1.msra.mxu0 0.0
      %289 = vmatprep.subr.mxu0 0.0
      %290 = vmatpush1.msra.mxu0 0.0
      %291 = vmatprep.subr.mxu0 0.0
      %292 = vmatpush1.msra.mxu0 0.0
      %293 = vmatprep.subr.mxu0 0.0
      %294 = vmatpush1.msra.mxu0 0.0
      %295 = vmatprep.subr.mxu0 0.0
      %296 = vmatpush1.msra.mxu0 0.0
      %297 = vmatprep.subr.mxu0 0.0
      %298 = vmatpush1.msra.mxu0 0.0
      %299 = vmatprep.subr.mxu0 0.0
      %300 = vmatpush1.msra.mxu0 0.0
      %301 = vmatprep.subr.mxu0 0.0
      %302 = vmatpush1.msra.mxu0 0.0
      %303 = vmatprep.subr.mxu0 0.0
      %304 = vmatpush1.msra.mxu0 0.0
      %305 = vmatprep.subr.mxu0 0.0
      %306 = vmatpush1.msra.mxu0 0.0
      %307 = vmatprep.subr.mxu0 0.0
      %308 = vmatpush1.msra.mxu0 0.0
      %309 = vmatprep.subr.mxu0 0.0
      %310 = vmatpush1.msra.mxu0 0.0
      %311 = vmatprep.subr.mxu0 0.0
      %312 = vmatpush1.msra.mxu0 0.0
      %313 = vmatprep.subr.mxu0 0.0
      %314 = vmatpush1.msra.mxu0 0.0
      %315 = vmatprep.subr.mxu0 0.0
      %316 = vmatpush1.msra.mxu0 0.0
      %317 = vmatprep.subr.mxu0 0.0
      %318 = vmatpush1.msra.mxu0 0.0
      %319 = vmatprep.subr.mxu0 0.0
      %320 = vmatpush1.msra.mxu0 0.0
      %321 = vmatprep.subr.mxu0 0.0
      %322 = vmatpush1.msra.mxu0 0.0
      %323 = vmatprep.subr.mxu0 0.0
      %324 = vmatpush1.msra.mxu0 0.0
      %325 = vmatprep.subr.mxu0 0.0
      %326 = vmatpush1.msra.mxu0 0.0
      %327 = vmatprep.mubr.f32.mxu0 0.0
      %328 = vmatmul.mubr.f32.gmra.mrb[0].mxu0 %v258
      %v329 = vpop.f32.mrb[0].mxu0
      %v330 = vadd.f32 %v249, %v329
      %v331 = vpop.f32.mrb[0].mxu0
      %v332 = vadd.f32 %v249, %v331
      %333 = vmatprep.mubr.f32.mxu0 0.0
      %334 = vmatmul.mubr.f32.gmra.mrb[0].mxu0 %v261
      %v335 = vpop.f32.mrb[0].mxu0
      %v336 = vadd.f32 %v254, %v335
      %v337 = vpop.f32.mrb[0].mxu0
      %v338 = vadd.f32 %v254, %v337
      %339 = vdwg.mxu0
      %340 = vmatprep.subr.mxu0 %v217
      %341 = vmatpush1.msra.mxu0 %v216
      %342 = vmatprep.subr.mxu0 %v225
      %343 = vmatpush1.msra.mxu0 %v224
      %344 = vmatprep.subr.mxu0 %v233
      %345 = vmatpush1.msra.mxu0 %v232
      %346 = vmatprep.subr.mxu0 %v241
      %347 = vmatpush1.msra.mxu0 %v240
      %348 = vmatprep.subr.mxu0 0.0
      %349 = vmatpush1.msra.mxu0 0.0
      %350 = vmatprep.subr.mxu0 0.0
      %351 = vmatpush1.msra.mxu0 0.0
      %352 = vmatprep.subr.mxu0 0.0
      %353 = vmatpush1.msra.mxu0 0.0
      %354 = vmatprep.subr.mxu0 0.0
      %355 = vmatpush1.msra.mxu0 0.0
      %356 = vmatprep.subr.mxu0 0.0
      %357 = vmatpush1.msra.mxu0 0.0
      %358 = vmatprep.subr.mxu0 0.0
      %359 = vmatpush1.msra.mxu0 0.0
      %360 = vmatprep.subr.mxu0 0.0
      %361 = vmatpush1.msra.mxu0 0.0
      %362 = vmatprep.subr.mxu0 0.0
      %363 = vmatpush1.msra.mxu0 0.0
      %364 = vmatprep.subr.mxu0 0.0
      %365 = vmatpush1.msra.mxu0 0.0
      %366 = vmatprep.subr.mxu0 0.0
      %367 = vmatpush1.msra.mxu0 0.0
      %368 = vmatprep.subr.mxu0 0.0
      %369 = vmatpush1.msra.mxu0 0.0
      %370 = vmatprep.subr.mxu0 0.0
      %371 = vmatpush1.msra.mxu0 0.0
      %372 = vmatprep.subr.mxu0 0.0
      %373 = vmatpush1.msra.mxu0 0.0
      %374 = vmatprep.subr.mxu0 0.0
      %375 = vmatpush1.msra.mxu0 0.0
      %376 = vmatprep.subr.mxu0 0.0
      %377 = vmatpush1.msra.mxu0 0.0
      %378 = vmatprep.subr.mxu0 0.0
      %379 = vmatpush1.msra.mxu0 0.0
      %380 = vmatprep.subr.mxu0 0.0
      %381 = vmatpush1.msra.mxu0 0.0
      %382 = vmatprep.subr.mxu0 0.0
      %383 = vmatpush1.msra.mxu0 0.0
      %384 = vmatprep.subr.mxu0 0.0
      %385 = vmatpush1.msra.mxu0 0.0
      %386 = vmatprep.subr.mxu0 0.0
      %387 = vmatpush1.msra.mxu0 0.0
      %388 = vmatprep.subr.mxu0 0.0
      %389 = vmatpush1.msra.mxu0 0.0
      %390 = vmatprep.subr.mxu0 0.0
      %391 = vmatpush1.msra.mxu0 0.0
      %392 = vmatprep.subr.mxu0 0.0
      %393 = vmatpush1.msra.mxu0 0.0
      %394 = vmatprep.subr.mxu0 0.0
      %395 = vmatpush1.msra.mxu0 0.0
      %396 = vmatprep.subr.mxu0 0.0
      %397 = vmatpush1.msra.mxu0 0.0
      %398 = vmatprep.subr.mxu0 0.0
      %399 = vmatpush1.msra.mxu0 0.0
      %400 = vmatprep.subr.mxu0 0.0
      %401 = vmatpush1.msra.mxu0 0.0
      %402 = vmatprep.subr.mxu0 0.0
      %403 = vmatpush1.msra.mxu0 0.0
      %404 = vmatprep.mubr.f32.mxu0 0.0
      %405 = vmatmul.mubr.f32.gmra.mrb[0].mxu0 %v258
      %v406 = vpop.f32.mrb[0].mxu0
      %v407 = vadd.f32 %v249, %v406
      %v408 = vpop.f32.mrb[0].mxu0
      %v409 = vadd.f32 %v249, %v408
      %410 = vmatprep.mubr.f32.mxu0 0.0
      %411 = vmatmul.mubr.f32.gmra.mrb[0].mxu0 %v261
      %v412 = vpop.f32.mrb[0].mxu0
      %v413 = vadd.f32 %v254, %v412
      %v414 = vpop.f32.mrb[0].mxu0
      %v415 = vadd.f32 %v254, %v414
      %416 = vdwg.mxu0
      %417 = vmatprep.subr.mxu0 %v219
      %418 = vmatpush1.msra.mxu0 %v218
      %419 = vmatprep.subr.mxu0 %v227
      %420 = vmatpush1.msra.mxu0 %v226
      %421 = vmatprep.subr.mxu0 %v235
      %422 = vmatpush1.msra.mxu0 %v234
      %423 = vmatprep.subr.mxu0 %v243
      %424 = vmatpush1.msra.mxu0 %v242
      %425 = vmatprep.subr.mxu0 0.0
      %426 = vmatpush1.msra.mxu0 0.0
      %427 = vmatprep.subr.mxu0 0.0
      %428 = vmatpush1.msra.mxu0 0.0
      %429 = vmatprep.subr.mxu0 0.0
      %430 = vmatpush1.msra.mxu0 0.0
      %431 = vmatprep.subr.mxu0 0.0
      %432 = vmatpush1.msra.mxu0 0.0
      %433 = vmatprep.subr.mxu0 0.0
      %434 = vmatpush1.msra.mxu0 0.0
      %435 = vmatprep.subr.mxu0 0.0
      %436 = vmatpush1.msra.mxu0 0.0
      %437 = vmatprep.subr.mxu0 0.0
      %438 = vmatpush1.msra.mxu0 0.0
      %439 = vmatprep.subr.mxu0 0.0
      %440 = vmatpush1.msra.mxu0 0.0
      %441 = vmatprep.subr.mxu0 0.0
      %442 = vmatpush1.msra.mxu0 0.0
      %443 = vmatprep.subr.mxu0 0.0
      %444 = vmatpush1.msra.mxu0 0.0
      %445 = vmatprep.subr.mxu0 0.0
      %446 = vmatpush1.msra.mxu0 0.0
      %447 = vmatprep.subr.mxu0 0.0
      %448 = vmatpush1.msra.mxu0 0.0
      %449 = vmatprep.subr.mxu0 0.0
      %450 = vmatpush1.msra.mxu0 0.0
      %451 = vmatprep.subr.mxu0 0.0
      %452 = vmatpush1.msra.mxu0 0.0
      %453 = vmatprep.subr.mxu0 0.0
      %454 = vmatpush1.msra.mxu0 0.0
      %455 = vmatprep.subr.mxu0 0.0
      %456 = vmatpush1.msra.mxu0 0.0
      %457 = vmatprep.subr.mxu0 0.0
      %458 = vmatpush1.msra.mxu0 0.0
      %459 = vmatprep.subr.mxu0 0.0
      %460 = vmatpush1.msra.mxu0 0.0
      %461 = vmatprep.subr.mxu0 0.0
      %462 = vmatpush1.msra.mxu0 0.0
      %463 = vmatprep.subr.mxu0 0.0
      %464 = vmatpush1.msra.mxu0 0.0
      %465 = vmatprep.subr.mxu0 0.0
      %466 = vmatpush1.msra.mxu0 0.0
      %467 = vmatprep.subr.mxu0 0.0
      %468 = vmatpush1.msra.mxu0 0.0
      %469 = vmatprep.subr.mxu0 0.0
      %470 = vmatpush1.msra.mxu0 0.0
      %471 = vmatprep.subr.mxu0 0.0
      %472 = vmatpush1.msra.mxu0 0.0
      %473 = vmatprep.subr.mxu0 0.0
      %474 = vmatpush1.msra.mxu0 0.0
      %475 = vmatprep.subr.mxu0 0.0
      %476 = vmatpush1.msra.mxu0 0.0
      %477 = vmatprep.subr.mxu0 0.0
      %478 = vmatpush1.msra.mxu0 0.0
      %479 = vmatprep.subr.mxu0 0.0
      %480 = vmatpush1.msra.mxu0 0.0
      %481 = vmatprep.mubr.f32.mxu0 0.0
      %482 = vmatmul.mubr.f32.gmra.mrb[0].mxu0 %v258
      %v483 = vpop.f32.mrb[0].mxu0
      %v484 = vadd.f32 %v249, %v483
      %v485 = vpop.f32.mrb[0].mxu0
      %v486 = vadd.f32 %v249, %v485
      %487 = vmatprep.mubr.f32.mxu0 0.0
      %488 = vmatmul.mubr.f32.gmra.mrb[0].mxu0 %v261
      %v489 = vpop.f32.mrb[0].mxu0
      %v490 = vadd.f32 %v254, %v489
      %v491 = vpop.f32.mrb[0].mxu0
      %v492 = vadd.f32 %v254, %v491
      %493 = vdwg.mxu0
      %494 = vmatprep.subr.mxu0 %v221
      %495 = vmatpush1.msra.mxu0 %v220
      %496 = vmatprep.subr.mxu0 %v229
      %497 = vmatpush1.msra.mxu0 %v228
      %498 = vmatprep.subr.mxu0 %v237
      %499 = vmatpush1.msra.mxu0 %v236
      %500 = vmatprep.subr.mxu0 %v245
      %501 = vmatpush1.msra.mxu0 %v244
      %502 = vmatprep.subr.mxu0 0.0
      %503 = vmatpush1.msra.mxu0 0.0
      %504 = vmatprep.subr.mxu0 0.0
      %505 = vmatpush1.msra.mxu0 0.0
      %506 = vmatprep.subr.mxu0 0.0
      %507 = vmatpush1.msra.mxu0 0.0
      %508 = vmatprep.subr.mxu0 0.0
      %509 = vmatpush1.msra.mxu0 0.0
      %510 = vmatprep.subr.mxu0 0.0
      %511 = vmatpush1.msra.mxu0 0.0
      %512 = vmatprep.subr.mxu0 0.0
      %513 = vmatpush1.msra.mxu0 0.0
      %514 = vmatprep.subr.mxu0 0.0
      %515 = vmatpush1.msra.mxu0 0.0
      %516 = vmatprep.subr.mxu0 0.0
      %517 = vmatpush1.msra.mxu0 0.0
      %518 = vmatprep.subr.mxu0 0.0
      %519 = vmatpush1.msra.mxu0 0.0
      %520 = vmatprep.subr.mxu0 0.0
      %521 = vmatpush1.msra.mxu0 0.0
      %522 = vmatprep.subr.mxu0 0.0
      %523 = vmatpush1.msra.mxu0 0.0
      %524 = vmatprep.subr.mxu0 0.0
      %525 = vmatpush1.msra.mxu0 0.0
      %526 = vmatprep.subr.mxu0 0.0
      %527 = vmatpush1.msra.mxu0 0.0
      %528 = vmatprep.subr.mxu0 0.0
      %529 = vmatpush1.msra.mxu0 0.0
      %530 = vmatprep.subr.mxu0 0.0
      %531 = vmatpush1.msra.mxu0 0.0
      %532 = vmatprep.subr.mxu0 0.0
      %533 = vmatpush1.msra.mxu0 0.0
      %534 = vmatprep.subr.mxu0 0.0
      %535 = vmatpush1.msra.mxu0 0.0
      %536 = vmatprep.subr.mxu0 0.0
      %537 = vmatpush1.msra.mxu0 0.0
      %538 = vmatprep.subr.mxu0 0.0
      %539 = vmatpush1.msra.mxu0 0.0
      %540 = vmatprep.subr.mxu0 0.0
      %541 = vmatpush1.msra.mxu0 0.0
      %542 = vmatprep.subr.mxu0 0.0
      %543 = vmatpush1.msra.mxu0 0.0
      %544 = vmatprep.subr.mxu0 0.0
      %545 = vmatpush1.msra.mxu0 0.0
      %546 = vmatprep.subr.mxu0 0.0
      %547 = vmatpush1.msra.mxu0 0.0
      %548 = vmatprep.subr.mxu0 0.0
      %549 = vmatpush1.msra.mxu0 0.0
      %550 = vmatprep.subr.mxu0 0.0
      %551 = vmatpush1.msra.mxu0 0.0
      %552 = vmatprep.subr.mxu0 0.0
      %553 = vmatpush1.msra.mxu0 0.0
      %554 = vmatprep.subr.mxu0 0.0
      %555 = vmatpush1.msra.mxu0 0.0
      %556 = vmatprep.subr.mxu0 0.0
      %557 = vmatpush1.msra.mxu0 0.0
      %558 = vmatprep.mubr.f32.mxu0 0.0
      %559 = vmatmul.mubr.f32.gmra.mrb[0].mxu0 %v258
      %v560 = vpop.f32.mrb[0].mxu0
      %v561 = vadd.f32 %v249, %v560
      %v562 = vpop.f32.mrb[0].mxu0
      %v563 = vadd.f32 %v249, %v562
      %564 = vmatprep.mubr.f32.mxu0 0.0
      %565 = vmatmul.mubr.f32.gmra.mrb[0].mxu0 %v261
      %v566 = vpop.f32.mrb[0].mxu0
      %v567 = vadd.f32 %v254, %v566
      %v568 = vpop.f32.mrb[0].mxu0
      %v569 = vadd.f32 %v254, %v568
      %570 = vdwg.mxu0
      %571 = vst [vmem:[%s208] sm:$0xff] %v330
      %572 = vst [vmem:[%s208 + $0x8] sm:$0xff] %v332
      %573 = vst [vmem:[%s208 + $0x10] sm:$0xff] %v407
      %574 = vst [vmem:[%s208 + $0x18] sm:$0xff] %v409
      %575 = vst [vmem:[%s208 + $0x20] sm:$0xff] %v484
      %576 = vst [vmem:[%s208 + $0x28] sm:$0xff] %v486
      %577 = vst [vmem:[%s208 + $0x30] sm:$0xff] %v561
      %578 = vst [vmem:[%s208 + $0x38] sm:$0xff] %v563
      %579 = vst [vmem:[%s208 + $0x40] sm:$0x3] %v336
      %580 = vst [vmem:[%s208 + $0x48] sm:$0x3] %v338
      %581 = vst [vmem:[%s208 + $0x50] sm:$0x3] %v413
      %582 = vst [vmem:[%s208 + $0x58] sm:$0x3] %v415
      %583 = vst [vmem:[%s208 + $0x60] sm:$0x3] %v490
      %584 = vst [vmem:[%s208 + $0x68] sm:$0x3] %v492
      %585 = vst [vmem:[%s208 + $0x70] sm:$0x3] %v567
      %586 = vst [vmem:[%s208 + $0x78] sm:$0x3] %v569
      %s587 = smul.u32 8, %s19
      %p588 = scmp.lt.s32.totalorder %s18, 1
      %s589 = scalar_select %p588, %s18, 1
      %p590 = scmp.lt.s32.totalorder %s587, 7
      %s591 = scalar_select %p590, %s587, 7
      %s592 = smul.addr %s589, 16
      %s593 = sadd.s32 %s591, %s592
      %s594 = smul.addr %s593, 8
      %s595 = scalar_lea.vmem %s3, %s594
      // Predicated region
      $region33: #{out_conv.1} parent=31 // pred_check
        %p596 = pneg %p116
      $region34: #{out_conv.1} parent=31 // pred_check_branch
        %598 = sbr.rel (%p596) target = $region36
      $region35: #{out_conv.1} parent=31 // pred_region
        %s599 = smul.u32 8, %s19
      $region36: #{out_conv.1} parent=31 // pred_fallthru
        _
    $region32: #{out_conv.1} parent=5 // pred_fallthru
      _
    %p600 = scmp.le.s32.totalorder 2, %s9
    // Predicated region
    $region37: #{out_conv.1} parent=5 // pred_check
      %p601 = pneg %p600
    $region38: #{out_conv.1} parent=5 // pred_check_branch
      %603 = sbr.rel (%p601) target = $region40
    $region39: #{out_conv.1} parent=5 // pred_region
      %s604 = ssub.s32 %s9, 2
      // Predicated region
      $region41: #{out_conv.1} parent=39 // pred_check
        %p605 = pneg %p122
      $region42: #{out_conv.1} parent=39 // pred_check_branch
        %607 = sbr.rel (%p605) target = $region44
      $region43: #{out_conv.1} parent=39 // pred_region
        %s608 = smul.u32 8, %s21
        %p609 = scmp.lt.s32.totalorder %s20, 1
        %s610 = scalar_select %p609, %s20, 1
        %p611 = scmp.lt.s32.totalorder %s608, 7
        %s612 = scalar_select %p611, %s608, 7
        %s613 = smul.addr %s610, 16
        %s614 = sadd.s32 %s612, %s613
        %s615 = smul.addr %s614, 8
        %s616 = scalar_lea.vmem %s3, %s615
      $region44: #{out_conv.1} parent=39 // pred_fallthru
        _
    $region40: #{out_conv.1} parent=5 // pred_fallthru
      _
  $region6: #{out_conv.1} parent=0 // loop_footer
    %s13 = sadd.s32 1, %s9
  $region7: #{out_conv.1} parent=0 // loop_footer_branch
    %8 = sbr.rel target = $region3
  $region8: #{out_conv.1} parent=0 // loop_exit
    _

</llo_original>
